<compile_context>
chip_gen: v5e
topology: v5e:2x2
jax: 0.10.0
libtpu: 0.0.40
codegen_flags: <defaults>
</compile_context>

<pallas_src>
import jax
import jax.numpy as jnp
from jax.experimental import pallas as pl
from jax.experimental.pallas import tpu as pltpu

# -------------------- config (mirrors args of the PyTorch module) -----------
DIMS = 32                      # self.dims
NUM_BNKS = 8                   # args.num_bnks
NUM_LAYERS = 3                 # args.bnks_layers
D1 = DIMS + NUM_BNKS           # per-stream hidden width (40)
D2 = 2 * D1                    # fused [bbox | vel] hidden width (80)

BATCH = 2
SEQ = 8

# Exact-f32 MXU matmuls (multi-pass) so the in-file f32 self-test holds at
# 1e-5.  Set to jax.lax.Precision.DEFAULT for single-pass bf16-grade matmuls
# when exact f32 parity is not needed.
MATMUL_PRECISION = jax.lax.Precision.HIGHEST


# -------------------- Pallas kernel ------------------------------------------
def _bottlenecks_kernel(x_ref, w_ref, b_ref, out_ref):
    # Pure serial matmul + bias + ReLU chain on the MXU; all cut()/concat()/
    # bottleneck-add structure is folded into the stacked weights.
    h = x_ref[...]                                           # [M, 80]
    for i in range(NUM_LAYERS):                              # static unroll
        h = jnp.maximum(
            jnp.dot(h, w_ref[i],
                    precision=MATMUL_PRECISION,
                    preferred_element_type=jnp.float32) + b_ref[i],
            0.0)
    # Last layer was pre-compacted on the host: cols 0:8 = bnk_bbox,
    # cols 8:16 = bnk_vel.  Final bottleneck = elementwise add (VPU).
    out_ref[...] = (h[:, :NUM_BNKS] +
                    h[:, NUM_BNKS:2 * NUM_BNKS]).astype(out_ref.dtype)


# -------------------- host-side weight folding (run ONCE at init) -----------
def fold_params(params):
    """Fold cut/concat/bottleneck-add/final-extraction into stacked weights.

    Returns (w_stack [L, 80, 80], b_stack [L, 1, 80]).  Construction is pure
    row/column placement (no matmuls), hence bit-exact in f32.
    """
    wb0, bb0, wv0, bv0, wbr, bbr, wvr, bvr = params
    f32 = jnp.float32

    # Layer 0: block-diagonal Linear on x_pad = [bbox(32) | vel(32) | 0(16)].
    w0 = jnp.zeros((D2, D2), f32)
    w0 = w0.at[:DIMS, :D1].set(wb0)
    w0 = w0.at[DIMS:2 * DIMS, D1:].set(wv0)
    b0 = jnp.concatenate([bb0, bv0], axis=-1)                  # [1, 80]

    ws = [w0]
    bs = [b0]

    # Layers 1..L-1: h = [hb | hv]; next bbox input = concat(hb[:, :32],
    # bnk_b + bnk_v), next vel input = concat(hv[:, :32], bnk_b + bnk_v).
    # Implemented by duplicating the bottleneck weight rows (exact copies).
    z = jnp.zeros((DIMS, D1), f32)
    for i in range(NUM_LAYERS - 1):
        aug_b = jnp.concatenate(                                # [80, 40]
            [wbr[i][:DIMS], wbr[i][DIMS:], z, wbr[i][DIMS:]], axis=0)
        aug_v = jnp.concatenate(                                # [80, 40]
            [z, wvr[i][DIMS:], wvr[i][:DIMS], wvr[i][DIMS:]], axis=0)
        ws.append(jnp.concatenate([aug_b, aug_v], axis=-1))     # [80, 80]
        bs.append(jnp.concatenate([bbr[i], bvr[i]], axis=-1))   # [1, 80]

    # Final layer: keep only the 16 bottleneck-producing output columns
    # (bbox cols 32:40, vel cols 72:80), compacted into cols 0:16.
    sel = jnp.array(list(range(DIMS, D1)) + list(range(D1 + DIMS, D2)),
                    jnp.int32)
    w_last = jnp.zeros((D2, D2), f32).at[:, :2 * NUM_BNKS].set(ws[-1][:, sel])
    b_last = jnp.zeros((1, D2), f32).at[:, :2 * NUM_BNKS].set(bs[-1][:, sel])
    ws[-1] = w_last
    bs[-1] = b_last

    return jnp.stack(ws, axis=0), jnp.stack(bs, axis=0)


# -------------------- wrapper -------------------------------------------------
def bottlenecks_forward(bbox, vel, w_stack, b_stack):
    """bbox, vel: [B, S, DIMS]; w_stack/b_stack: pre-folded (fold_params).

    Returns bottlenecks: [B, S, NUM_BNKS].
    """
    B, S, _ = bbox.shape
    M = B * S

    # Fuse + zero-pad the two input streams to the 80-wide kernel layout.
    x = jnp.concatenate(
        [bbox.reshape(M, DIMS),
         vel.reshape(M, DIMS),
         jnp.zeros((M, D2 - 2 * DIMS), jnp.float32)], axis=-1)   # [M, 80]

    vmem = pl.BlockSpec(memory_space=pltpu.MemorySpace.VMEM)
    out = pl.pallas_call(
        _bottlenecks_kernel,
        out_shape=jax.ShapeDtypeStruct((M, NUM_BNKS), jnp.float32),
        in_specs=[vmem, vmem, vmem],
        out_specs=vmem,
    )(x, w_stack, b_stack)

    return out.reshape(B, S, NUM_BNKS)


# -------------------- pure-JAX reference (original, un-folded math) ----------
def bottlenecks_ref(bbox, vel, params):
    wb0, bb0, wv0, bv0, wbr, bbr, wvr, bvr = params
    relu = lambda t: jnp.maximum(t, 0.0)
    mm = lambda a, w: jnp.matmul(a, w, precision=jax.lax.Precision.HIGHEST)
    hb = relu(mm(bbox, wb0) + bb0[0])
    hv = relu(mm(vel, wv0) + bv0[0])
    b, bnk_b = hb[..., :DIMS], hb[..., DIMS:]
    v, bnk_v = hv[..., :DIMS], hv[..., DIMS:]
    bott = bnk_b + bnk_v
    for i in range(NUM_LAYERS - 1):
        hb = relu(mm(jnp.concatenate([b, bott], -1), wbr[i]) + bbr[i, 0])
        hv = relu(mm(jnp.concatenate([v, bott], -1), wvr[i]) + bvr[i, 0])
        b, bnk_b = hb[..., :DIMS], hb[..., DIMS:]
        v, bnk_v = hv[..., :DIMS], hv[..., DIMS:]
        bott = bnk_b + bnk_v
    return bott


# -------------------- deterministic parameter init ---------------------------
def init_params(key):
    ks = jax.random.split(key, 8)
    scale0 = 1.0 / jnp.sqrt(DIMS)
    scale1 = 1.0 / jnp.sqrt(D1)
    nrest = NUM_LAYERS - 1
    wb0 = jax.random.uniform(ks[0], (DIMS, D1), jnp.float32, -scale0, scale0)
    bb0 = jax.random.uniform(ks[1], (1, D1), jnp.float32, -scale0, scale0)
    wv0 = jax.random.uniform(ks[2], (DIMS, D1), jnp.float32, -scale0, scale0)
    bv0 = jax.random.uniform(ks[3], (1, D1), jnp.float32, -scale0, scale0)
    wbr = jax.random.uniform(ks[4], (nrest, D1, D1), jnp.float32, -scale1, scale1)
    bbr = jax.random.uniform(ks[5], (nrest, 1, D1), jnp.float32, -scale1, scale1)
    wvr = jax.random.uniform(ks[6], (nrest, D1, D1), jnp.float32, -scale1, scale1)
    bvr = jax.random.uniform(ks[7], (nrest, 1, D1), jnp.float32, -scale1, scale1)
    return (wb0, bb0, wv0, bv0, wbr, bbr, wvr, bvr)


if __name__ == "__main__":
    key = jax.random.PRNGKey(0)
    kp, kb, kv = jax.random.split(key, 3)
    params = init_params(kp)
    bbox = jax.random.normal(kb, (BATCH, SEQ, DIMS), jnp.float32)
    vel = jax.random.normal(kv, (BATCH, SEQ, DIMS), jnp.float32)

    # Weight folding hoisted out of the per-call path (done once at init).
    w_stack, b_stack = jax.block_until_ready(fold_params(params))

    fwd = jax.jit(bottlenecks_forward)
    out = jax.block_until_ready(fwd(bbox, vel, w_stack, b_stack))

    ref = bottlenecks_ref(bbox, vel, params)
    assert out.shape == (BATCH, SEQ, NUM_BNKS)
    assert jnp.allclose(out, ref, atol=1e-5, rtol=1e-5), "mismatch vs reference"

    print("KERNEL_OK")
</pallas_src>

<mosaic_0001>
module attributes {stable_mosaic.version = 11 : i64} {
  func.func @_bottlenecks_kernel(%arg0: memref<16x80xf32, #tpu.memory_space<vmem>>, %arg1: memref<3x80x80xf32, #tpu.memory_space<vmem>>, %arg2: memref<3x1x80xf32, #tpu.memory_space<vmem>>, %arg3: memref<16x8xf32, #tpu.memory_space<vmem>>) attributes {dimension_semantics = [], scalar_prefetch = 0 : i64, scratch_operands = 0 : i64, tpu.core_type = #tpu.core_type<tc>} {
    %c0 = arith.constant 0 : index
    %c0_0 = arith.constant 0 : index
    %0 = vector.load %arg0[%c0, %c0_0] : memref<16x80xf32, #tpu.memory_space<vmem>>, vector<16x80xf32>
    %c0_1 = arith.constant 0 : index
    %c0_2 = arith.constant 0 : index
    %c0_3 = arith.constant 0 : index
    %1 = vector.load %arg1[%c0_1, %c0_2, %c0_3] : memref<3x80x80xf32, #tpu.memory_space<vmem>>, vector<1x80x80xf32>
    %2 = vector.shape_cast %1 : vector<1x80x80xf32> to vector<80x80xf32>
    %cst = arith.constant dense<0.000000e+00> : vector<16x80xf32>
    %3 = tpu.matmul %0, %2, %cst {dimension_numbers = #tpu.dot_dimension_numbers<[1], [0], [0], [1], [0, 0, 1, 1], [], []>, precision = #tpu.contract_precision<fp32>} : vector<16x80xf32>, vector<80x80xf32>, vector<16x80xf32> -> vector<16x80xf32>
    %c0_4 = arith.constant 0 : index
    %c0_5 = arith.constant 0 : index
    %c0_6 = arith.constant 0 : index
    %4 = vector.load %arg2[%c0_4, %c0_5, %c0_6] : memref<3x1x80xf32, #tpu.memory_space<vmem>>, vector<1x1x80xf32>
    %5 = vector.shape_cast %4 : vector<1x1x80xf32> to vector<1x80xf32>
    %6 = vector.broadcast %5 : vector<1x80xf32> to vector<16x80xf32>
    %7 = arith.addf %3, %6 : vector<16x80xf32>
    %cst_7 = arith.constant 0.000000e+00 : f32
    %8 = vector.broadcast %cst_7 : f32 to vector<16x80xf32>
    %9 = arith.maximumf %7, %8 : vector<16x80xf32>
    %c1 = arith.constant 1 : index
    %c0_8 = arith.constant 0 : index
    %c0_9 = arith.constant 0 : index
    %10 = vector.load %arg1[%c1, %c0_8, %c0_9] : memref<3x80x80xf32, #tpu.memory_space<vmem>>, vector<1x80x80xf32>
    %11 = vector.shape_cast %10 : vector<1x80x80xf32> to vector<80x80xf32>
    %cst_10 = arith.constant dense<0.000000e+00> : vector<16x80xf32>
    %12 = tpu.matmul %9, %11, %cst_10 {dimension_numbers = #tpu.dot_dimension_numbers<[1], [0], [0], [1], [0, 0, 1, 1], [], []>, precision = #tpu.contract_precision<fp32>} : vector<16x80xf32>, vector<80x80xf32>, vector<16x80xf32> -> vector<16x80xf32>
    %c1_11 = arith.constant 1 : index
    %c0_12 = arith.constant 0 : index
    %c0_13 = arith.constant 0 : index
    %13 = vector.load %arg2[%c1_11, %c0_12, %c0_13] : memref<3x1x80xf32, #tpu.memory_space<vmem>>, vector<1x1x80xf32>
    %14 = vector.shape_cast %13 : vector<1x1x80xf32> to vector<1x80xf32>
    %15 = vector.broadcast %14 : vector<1x80xf32> to vector<16x80xf32>
    %16 = arith.addf %12, %15 : vector<16x80xf32>
    %cst_14 = arith.constant 0.000000e+00 : f32
    %17 = vector.broadcast %cst_14 : f32 to vector<16x80xf32>
    %18 = arith.maximumf %16, %17 : vector<16x80xf32>
    %c2 = arith.constant 2 : index
    %c0_15 = arith.constant 0 : index
    %c0_16 = arith.constant 0 : index
    %19 = vector.load %arg1[%c2, %c0_15, %c0_16] : memref<3x80x80xf32, #tpu.memory_space<vmem>>, vector<1x80x80xf32>
    %20 = vector.shape_cast %19 : vector<1x80x80xf32> to vector<80x80xf32>
    %cst_17 = arith.constant dense<0.000000e+00> : vector<16x80xf32>
    %21 = tpu.matmul %18, %20, %cst_17 {dimension_numbers = #tpu.dot_dimension_numbers<[1], [0], [0], [1], [0, 0, 1, 1], [], []>, precision = #tpu.contract_precision<fp32>} : vector<16x80xf32>, vector<80x80xf32>, vector<16x80xf32> -> vector<16x80xf32>
    %c2_18 = arith.constant 2 : index
    %c0_19 = arith.constant 0 : index
    %c0_20 = arith.constant 0 : index
    %22 = vector.load %arg2[%c2_18, %c0_19, %c0_20] : memref<3x1x80xf32, #tpu.memory_space<vmem>>, vector<1x1x80xf32>
    %23 = vector.shape_cast %22 : vector<1x1x80xf32> to vector<1x80xf32>
    %24 = vector.broadcast %23 : vector<1x80xf32> to vector<16x80xf32>
    %25 = arith.addf %21, %24 : vector<16x80xf32>
    %cst_21 = arith.constant 0.000000e+00 : f32
    %26 = vector.broadcast %cst_21 : f32 to vector<16x80xf32>
    %27 = arith.maximumf %25, %26 : vector<16x80xf32>
    %28 = vector.extract_strided_slice %27 {offsets = [0, 0], sizes = [16, 8], strides = [1, 1]} : vector<16x80xf32> to vector<16x8xf32>
    %29 = vector.extract_strided_slice %27 {offsets = [0, 8], sizes = [16, 8], strides = [1, 1]} : vector<16x80xf32> to vector<16x8xf32>
    %30 = arith.addf %28, %29 : vector<16x8xf32>
    %c0_22 = arith.constant 0 : index
    %c0_23 = arith.constant 0 : index
    %31 = vector.load %arg3[%c0_22, %c0_23] : memref<16x8xf32, #tpu.memory_space<vmem>>, vector<16x8xf32>
    tpu.vector_store %arg3[%c0_22, %c0_23], %30 {strides = array<i32>} : memref<16x8xf32, #tpu.memory_space<vmem>>, vector<16x8xf32>,
    return
  }
}

</mosaic_0001>

<llo_original>
// kernel: bottlenecks_forward.1
$region0: #{bottlenecks_forward.1}
  #allocation0 [shape = 'u32[]', space=smem, size = 0x4, offset = 0x4, fixed_abs, tag = 'smem constant byte address 0x4 - core index']
  #allocation1 [shape = 'u32[72,128]{1,0:T(1,128)}', space=vmem, size = 0x9000, scoped, tag = 'internal scratch']
  %s0 = inlined_call_operand.vmem [shape: f32[16,80], index: 0, kind: input, shape index: {}]
  %s1 = inlined_call_operand.hbm [shape: f32[3,80,80], index: 1, kind: input, shape index: {}]
  %s2 = inlined_call_operand.vmem [shape: f32[3,1,80], index: 2, kind: input, shape index: {}]
  %s3 = inlined_call_operand.hbm [shape: f32[16,8], index: 3, kind: output, shape index: {}]
  %s4 = sld [smem:[#allocation0]]
  $region26: #{bottlenecks_forward.1} parent=0
    _
  %s6 = ssub.s32 1, %s4
  %s7 = scalar_select 0, %s6, %s4
  $region1: #{bottlenecks_forward.1} parent=0
    #allocation2 [shape = 'u8[122880]{0}', space=vmem, size = 0x1e000, scoped, tag = 'input window, operand 1, single buffered']
    #allocation3 [shape = 's32[1]{0}', space=sflag, size = 0x4, scoped, tag = 'scoped memory for bottlenecks_forward.1']
    #allocation4 [shape = 's32[1]{0}', space=sflag, size = 0x4, scoped, tag = 'scoped memory for bottlenecks_forward.1']
    #allocation5 [shape = 'u8[8192]{0}', space=vmem, size = 0x2000, scoped, tag = 'output window, operand 0, single buffered']
    %8 = vsyncpa [#allocation3], 0
    %9 = vsyncpa [#allocation4], 0
    // Predicated region
    $region2: #{bottlenecks_forward.1} parent=1 // pred_check
      _
    $region3: #{bottlenecks_forward.1} parent=1 // pred_check_branch
      %11 = sbr.rel (0) target = $region5
    $region4: #{bottlenecks_forward.1} parent=1 // pred_region
      _
    $region5: #{bottlenecks_forward.1} parent=1 // pred_fallthru
      _
    // Predicated region
    $region6: #{bottlenecks_forward.1} parent=1 // pred_check
      _
    $region7: #{bottlenecks_forward.1} parent=1 // pred_check_branch
      %13 = sbr.rel (0) target = $region9
    $region8: #{bottlenecks_forward.1} parent=1 // pred_region
      %15 = vsyncadd [#allocation3], 0
      %s16 = sshll.u32 %s1, 4
      %s17 = int_to_ptr.hbm [resolvable:$true] %s16
      %s18 = sshll.u32 [#allocation2], 4
      %s19 = int_to_ptr.vmem [resolvable:$true] %s18
      %24 = dma.hbm_to_vmem [thread:$0]  %s17, 3840, %s19, [#allocation3], 128, 128, 8
    $region9: #{bottlenecks_forward.1} parent=1 // pred_fallthru
      _
    // Predicated region
    $region10: #{bottlenecks_forward.1} parent=1 // pred_check
      _
    $region11: #{bottlenecks_forward.1} parent=1 // pred_check_branch
      %26 = sbr.rel (0) target = $region13
    $region12: #{bottlenecks_forward.1} parent=1 // pred_region
      _
    $region13: #{bottlenecks_forward.1} parent=1 // pred_fallthru
      _
    // Predicated region
    $region14: #{bottlenecks_forward.1} parent=1 // pred_check
      _
    $region15: #{bottlenecks_forward.1} parent=1 // pred_check_branch
      %28 = sbr.rel (0) target = $region17
    $region16: #{bottlenecks_forward.1} parent=1 // pred_region
      %30 = dma.done [#allocation3], 3840
    $region17: #{bottlenecks_forward.1} parent=1 // pred_fallthru
      _
    %v31 = vld [vmem:[%s0] sm:$0xff]
    %v32 = vld [vmem:[%s0 + $0x8] sm:$0xff]
    %v33 = vld [vmem:[#allocation2] sm:$0xff]
    %v34 = vld [vmem:[#allocation2 + $0x8] sm:$0xff]
    %v35 = vld [vmem:[#allocation2 + $0x10] sm:$0xff]
    %v36 = vld [vmem:[#allocation2 + $0x18] sm:$0xff]
    %v37 = vld [vmem:[#allocation2 + $0x20] sm:$0xff]
    %v38 = vld [vmem:[#allocation2 + $0x28] sm:$0xff]
    %v39 = vld [vmem:[#allocation2 + $0x30] sm:$0xff]
    %v40 = vld [vmem:[#allocation2 + $0x38] sm:$0xff]
    %v41 = vld [vmem:[#allocation2 + $0x40] sm:$0xff]
    %v42 = vld [vmem:[#allocation2 + $0x48] sm:$0xff]
    %v43 = vld [vmem:[%s2] sm:$0x1]
    %v45 = vperm.slane %v43, 0
    %vm47 = vcmask 654336
    %v49 = vsel %vm47, %v31, 0
    %v52 = vsel %vm47, %v32, 0
    %54 = vmatpush.msra.mxu0 0.0
    %55 = vmatpush.msra.mxu0 0.0
    %56 = vmatpush.msra.mxu0 0.0
    %57 = vmatpush.msra.mxu0 0.0
    %58 = vmatpush.msra.mxu0 0.0
    %59 = vmatpush.msra.mxu0 0.0
    %v60 = vand.u32 %v42, 4294901760
    %61 = vmatpush.msra.mxu0 %v60
    %v62 = vand.u32 %v41, 4294901760
    %63 = vmatpush.msra.mxu0 %v62
    %v64 = vand.u32 %v40, 4294901760
    %65 = vmatpush.msra.mxu0 %v64
    %v66 = vand.u32 %v39, 4294901760
    %67 = vmatpush.msra.mxu0 %v66
    %v68 = vand.u32 %v38, 4294901760
    %69 = vmatpush.msra.mxu0 %v68
    %v70 = vand.u32 %v37, 4294901760
    %71 = vmatpush.msra.mxu0 %v70
    %v72 = vand.u32 %v36, 4294901760
    %73 = vmatpush.msra.mxu0 %v72
    %v74 = vand.u32 %v35, 4294901760
    %75 = vmatpush.msra.mxu0 %v74
    %v76 = vand.u32 %v34, 4294901760
    %77 = vmatpush.msra.mxu0 %v76
    %v78 = vand.u32 %v33, 4294901760
    %79 = vmatpush.msra.mxu0 %v78
    %v80 = vand.u32 %v49, 4294901760
    %v81 = vsub.f32 %v49, %v80
    %v82 = vand.u32 %v81, 4294901760
    %v83 = vsub.f32 %v81, %v82
    %v84 = vand.u32 %v83, 4294901760
    %85 = vmatmul.f32.gmra.mxu0 %v84
    %v86 = vpop.f32.mrf.mxu0
    %v87 = vadd.f32 %v45, %v86
    %v88 = vand.u32 %v52, 4294901760
    %v89 = vsub.f32 %v52, %v88
    %v90 = vand.u32 %v89, 4294901760
    %v91 = vsub.f32 %v89, %v90
    %v92 = vand.u32 %v91, 4294901760
    %93 = vmatmul.f32.gmra.mxu0 %v92
    %v94 = vpop.f32.mrf.mxu0
    %v95 = vadd.f32 %v45, %v94
    %96 = vdwg.mxu0
    %97 = vmatpush.msra.mxu0 0.0
    %98 = vmatpush.msra.mxu0 0.0
    %99 = vmatpush.msra.mxu0 0.0
    %100 = vmatpush.msra.mxu0 0.0
    %101 = vmatpush.msra.mxu0 0.0
    %102 = vmatpush.msra.mxu0 0.0
    %v103 = vand.u32 %v42, 4294901760
    %v104 = vsub.f32 %v42, %v103
    %v105 = vand.u32 %v104, 4294901760
    %v106 = vsub.f32 %v104, %v105
    %v107 = vand.u32 %v106, 4294901760
    %108 = vmatpush.msra.mxu0 %v107
    %v109 = vand.u32 %v41, 4294901760
    %v110 = vsub.f32 %v41, %v109
    %v111 = vand.u32 %v110, 4294901760
    %v112 = vsub.f32 %v110, %v111
    %v113 = vand.u32 %v112, 4294901760
    %114 = vmatpush.msra.mxu0 %v113
    %v115 = vand.u32 %v40, 4294901760
    %v116 = vsub.f32 %v40, %v115
    %v117 = vand.u32 %v116, 4294901760
    %v118 = vsub.f32 %v116, %v117
    %v119 = vand.u32 %v118, 4294901760
    %120 = vmatpush.msra.mxu0 %v119
    %v121 = vand.u32 %v39, 4294901760
    %v122 = vsub.f32 %v39, %v121
    %v123 = vand.u32 %v122, 4294901760
    %v124 = vsub.f32 %v122, %v123
    %v125 = vand.u32 %v124, 4294901760
    %126 = vmatpush.msra.mxu0 %v125
    %v127 = vand.u32 %v38, 4294901760
    %v128 = vsub.f32 %v38, %v127
    %v129 = vand.u32 %v128, 4294901760
    %v130 = vsub.f32 %v128, %v129
    %v131 = vand.u32 %v130, 4294901760
    %132 = vmatpush.msra.mxu0 %v131
    %v133 = vand.u32 %v37, 4294901760
    %v134 = vsub.f32 %v37, %v133
    %v135 = vand.u32 %v134, 4294901760
    %v136 = vsub.f32 %v134, %v135
    %v137 = vand.u32 %v136, 4294901760
    %138 = vmatpush.msra.mxu0 %v137
    %v139 = vand.u32 %v36, 4294901760
    %v140 = vsub.f32 %v36, %v139
    %v141 = vand.u32 %v140, 4294901760
    %v142 = vsub.f32 %v140, %v141
    %v143 = vand.u32 %v142, 4294901760
    %144 = vmatpush.msra.mxu0 %v143
    %v145 = vand.u32 %v35, 4294901760
    %v146 = vsub.f32 %v35, %v145
    %v147 = vand.u32 %v146, 4294901760
    %v148 = vsub.f32 %v146, %v147
    %v149 = vand.u32 %v148, 4294901760
    %150 = vmatpush.msra.mxu0 %v149
    %v151 = vand.u32 %v34, 4294901760
    %v152 = vsub.f32 %v34, %v151
    %v153 = vand.u32 %v152, 4294901760
    %v154 = vsub.f32 %v152, %v153
    %v155 = vand.u32 %v154, 4294901760
    %156 = vmatpush.msra.mxu0 %v155
    %v157 = vand.u32 %v33, 4294901760
    %v158 = vsub.f32 %v33, %v157
    %v159 = vand.u32 %v158, 4294901760
    %v160 = vsub.f32 %v158, %v159
    %v161 = vand.u32 %v160, 4294901760
    %162 = vmatpush.msra.mxu0 %v161
    %v163 = vand.u32 %v49, 4294901760
    %164 = vmatmul.f32.gmra.mxu0 %v163
    %v165 = vpop.f32.mrf.mxu0
    %v166 = vadd.f32 %v87, %v165
    %v167 = vand.u32 %v52, 4294901760
    %168 = vmatmul.f32.gmra.mxu0 %v167
    %v169 = vpop.f32.mrf.mxu0
    %v170 = vadd.f32 %v95, %v169
    %171 = vdwg.mxu0
    %172 = vmatpush.msra.mxu0 0.0
    %173 = vmatpush.msra.mxu0 0.0
    %174 = vmatpush.msra.mxu0 0.0
    %175 = vmatpush.msra.mxu0 0.0
    %176 = vmatpush.msra.mxu0 0.0
    %177 = vmatpush.msra.mxu0 0.0
    %v178 = vand.u32 %v42, 4294901760
    %v179 = vsub.f32 %v42, %v178
    %180 = vmatpush.msra.mxu0 %v179
    %v181 = vand.u32 %v41, 4294901760
    %v182 = vsub.f32 %v41, %v181
    %183 = vmatpush.msra.mxu0 %v182
    %v184 = vand.u32 %v40, 4294901760
    %v185 = vsub.f32 %v40, %v184
    %186 = vmatpush.msra.mxu0 %v185
    %v187 = vand.u32 %v39, 4294901760
    %v188 = vsub.f32 %v39, %v187
    %189 = vmatpush.msra.mxu0 %v188
    %v190 = vand.u32 %v38, 4294901760
    %v191 = vsub.f32 %v38, %v190
    %192 = vmatpush.msra.mxu0 %v191
    %v193 = vand.u32 %v37, 4294901760
    %v194 = vsub.f32 %v37, %v193
    %195 = vmatpush.msra.mxu0 %v194
    %v196 = vand.u32 %v36, 4294901760
    %v197 = vsub.f32 %v36, %v196
    %198 = vmatpush.msra.mxu0 %v197
    %v199 = vand.u32 %v35, 4294901760
    %v200 = vsub.f32 %v35, %v199
    %201 = vmatpush.msra.mxu0 %v200
    %v202 = vand.u32 %v34, 4294901760
    %v203 = vsub.f32 %v34, %v202
    %204 = vmatpush.msra.mxu0 %v203
    %v205 = vand.u32 %v33, 4294901760
    %v206 = vsub.f32 %v33, %v205
    %207 = vmatpush.msra.mxu0 %v206
    %v208 = vand.u32 %v49, 4294901760
    %v209 = vsub.f32 %v49, %v208
    %210 = vmatmul.f32.gmra.mxu0 %v209
    %v211 = vpop.f32.mrf.mxu0
    %v212 = vadd.f32 %v166, %v211
    %v213 = vand.u32 %v52, 4294901760
    %v214 = vsub.f32 %v52, %v213
    %215 = vmatmul.f32.gmra.mxu0 %v214
    %v216 = vpop.f32.mrf.mxu0
    %v217 = vadd.f32 %v170, %v216
    %218 = vdwg.mxu0
    %219 = vmatpush.msra.mxu0 0.0
    %220 = vmatpush.msra.mxu0 0.0
    %221 = vmatpush.msra.mxu0 0.0
    %222 = vmatpush.msra.mxu0 0.0
    %223 = vmatpush.msra.mxu0 0.0
    %224 = vmatpush.msra.mxu0 0.0
    %v225 = vand.u32 %v42, 4294901760
    %226 = vmatpush.msra.mxu0 %v225
    %v227 = vand.u32 %v41, 4294901760
    %228 = vmatpush.msra.mxu0 %v227
    %v229 = vand.u32 %v40, 4294901760
    %230 = vmatpush.msra.mxu0 %v229
    %v231 = vand.u32 %v39, 4294901760
    %232 = vmatpush.msra.mxu0 %v231
    %v233 = vand.u32 %v38, 4294901760
    %234 = vmatpush.msra.mxu0 %v233
    %v235 = vand.u32 %v37, 4294901760
    %236 = vmatpush.msra.mxu0 %v235
    %v237 = vand.u32 %v36, 4294901760
    %238 = vmatpush.msra.mxu0 %v237
    %v239 = vand.u32 %v35, 4294901760
    %240 = vmatpush.msra.mxu0 %v239
    %v241 = vand.u32 %v34, 4294901760
    %242 = vmatpush.msra.mxu0 %v241
    %v243 = vand.u32 %v33, 4294901760
    %244 = vmatpush.msra.mxu0 %v243
    %v245 = vand.u32 %v49, 4294901760
    %v246 = vsub.f32 %v49, %v245
    %v247 = vand.u32 %v246, 4294901760
    %248 = vmatmul.f32.gmra.mxu0 %v247
    %v249 = vpop.f32.mrf.mxu0
    %v250 = vadd.f32 %v212, %v249
    %v251 = vand.u32 %v52, 4294901760
    %v252 = vsub.f32 %v52, %v251
    %v253 = vand.u32 %v252, 4294901760
    %254 = vmatmul.f32.gmra.mxu0 %v253
    %v255 = vpop.f32.mrf.mxu0
    %v256 = vadd.f32 %v217, %v255
    %257 = vdwg.mxu0
    %258 = vmatpush.msra.mxu0 0.0
    %259 = vmatpush.msra.mxu0 0.0
    %260 = vmatpush.msra.mxu0 0.0
    %261 = vmatpush.msra.mxu0 0.0
    %262 = vmatpush.msra.mxu0 0.0
    %263 = vmatpush.msra.mxu0 0.0
    %v264 = vand.u32 %v42, 4294901760
    %v265 = vsub.f32 %v42, %v264
    %v266 = vand.u32 %v265, 4294901760
    %267 = vmatpush.msra.mxu0 %v266
    %v268 = vand.u32 %v41, 4294901760
    %v269 = vsub.f32 %v41, %v268
    %v270 = vand.u32 %v269, 4294901760
    %271 = vmatpush.msra.mxu0 %v270
    %v272 = vand.u32 %v40, 4294901760
    %v273 = vsub.f32 %v40, %v272
    %v274 = vand.u32 %v273, 4294901760
    %275 = vmatpush.msra.mxu0 %v274
    %v276 = vand.u32 %v39, 4294901760
    %v277 = vsub.f32 %v39, %v276
    %v278 = vand.u32 %v277, 4294901760
    %279 = vmatpush.msra.mxu0 %v278
    %v280 = vand.u32 %v38, 4294901760
    %v281 = vsub.f32 %v38, %v280
    %v282 = vand.u32 %v281, 4294901760
    %283 = vmatpush.msra.mxu0 %v282
    %v284 = vand.u32 %v37, 4294901760
    %v285 = vsub.f32 %v37, %v284
    %v286 = vand.u32 %v285, 4294901760
    %287 = vmatpush.msra.mxu0 %v286
    %v288 = vand.u32 %v36, 4294901760
    %v289 = vsub.f32 %v36, %v288
    %v290 = vand.u32 %v289, 4294901760
    %291 = vmatpush.msra.mxu0 %v290
    %v292 = vand.u32 %v35, 4294901760
    %v293 = vsub.f32 %v35, %v292
    %v294 = vand.u32 %v293, 4294901760
    %295 = vmatpush.msra.mxu0 %v294
    %v296 = vand.u32 %v34, 4294901760
    %v297 = vsub.f32 %v34, %v296
    %v298 = vand.u32 %v297, 4294901760
    %299 = vmatpush.msra.mxu0 %v298
    %v300 = vand.u32 %v33, 4294901760
    %v301 = vsub.f32 %v33, %v300
    %v302 = vand.u32 %v301, 4294901760
    %303 = vmatpush.msra.mxu0 %v302
    %v304 = vand.u32 %v49, 4294901760
    %305 = vmatmul.f32.gmra.mxu0 %v304
    %v306 = vpop.f32.mrf.mxu0
    %v307 = vadd.f32 %v250, %v306
    %v308 = vand.u32 %v52, 4294901760
    %309 = vmatmul.f32.gmra.mxu0 %v308
    %v310 = vpop.f32.mrf.mxu0
    %v311 = vadd.f32 %v256, %v310
    %312 = vdwg.mxu0
    %313 = vmatpush.msra.mxu0 0.0
    %314 = vmatpush.msra.mxu0 0.0
    %315 = vmatpush.msra.mxu0 0.0
    %316 = vmatpush.msra.mxu0 0.0
    %317 = vmatpush.msra.mxu0 0.0
    %318 = vmatpush.msra.mxu0 0.0
    %v319 = vand.u32 %v42, 4294901760
    %320 = vmatpush.msra.mxu0 %v319
    %v321 = vand.u32 %v41, 4294901760
    %322 = vmatpush.msra.mxu0 %v321
    %v323 = vand.u32 %v40, 4294901760
    %324 = vmatpush.msra.mxu0 %v323
    %v325 = vand.u32 %v39, 4294901760
    %326 = vmatpush.msra.mxu0 %v325
    %v327 = vand.u32 %v38, 4294901760
    %328 = vmatpush.msra.mxu0 %v327
    %v329 = vand.u32 %v37, 4294901760
    %330 = vmatpush.msra.mxu0 %v329
    %v331 = vand.u32 %v36, 4294901760
    %332 = vmatpush.msra.mxu0 %v331
    %v333 = vand.u32 %v35, 4294901760
    %334 = vmatpush.msra.mxu0 %v333
    %v335 = vand.u32 %v34, 4294901760
    %336 = vmatpush.msra.mxu0 %v335
    %v337 = vand.u32 %v33, 4294901760
    %338 = vmatpush.msra.mxu0 %v337
    %v339 = vand.u32 %v49, 4294901760
    %340 = vmatmul.f32.gmra.mxu0 %v339
    %v341 = vpop.f32.mrf.mxu0
    %v342 = vadd.f32 %v307, %v341
    %v343 = vand.u32 %v52, 4294901760
    %344 = vmatmul.f32.gmra.mxu0 %v343
    %v345 = vpop.f32.mrf.mxu0
    %v346 = vadd.f32 %v311, %v345
    %347 = vdwg.mxu0
    %v348 = vmax.f32 %v342, 0.0
    %v349 = vmax.f32 %v346, 0.0
    %s350 = scalar_lea.vmem [#allocation2], 80
    %v351 = vld [vmem:[%s350] sm:$0xff]
    %v352 = vld [vmem:[%s350 + $0x8] sm:$0xff]
    %v353 = vld [vmem:[%s350 + $0x10] sm:$0xff]
    %v354 = vld [vmem:[%s350 + $0x18] sm:$0xff]
    %v355 = vld [vmem:[%s350 + $0x20] sm:$0xff]
    %v356 = vld [vmem:[%s350 + $0x28] sm:$0xff]
    %v357 = vld [vmem:[%s350 + $0x30] sm:$0xff]
    %v358 = vld [vmem:[%s350 + $0x38] sm:$0xff]
    %v359 = vld [vmem:[%s350 + $0x40] sm:$0xff]
    %v360 = vld [vmem:[%s350 + $0x48] sm:$0xff]
    %s361 = scalar_lea.vmem %s2, 1
    %v362 = vld [vmem:[%s361] sm:$0x1]
    %v364 = vperm.slane %v362, 0
    %v367 = vsel %vm47, %v348, 0
    %v370 = vsel %vm47, %v349, 0
    %372 = vmatpush.msra.mxu0 0.0
    %373 = vmatpush.msra.mxu0 0.0
    %374 = vmatpush.msra.mxu0 0.0
    %375 = vmatpush.msra.mxu0 0.0
    %376 = vmatpush.msra.mxu0 0.0
    %377 = vmatpush.msra.mxu0 0.0
    %v378 = vand.u32 %v360, 4294901760
    %379 = vmatpush.msra.mxu0 %v378
    %v380 = vand.u32 %v359, 4294901760
    %381 = vmatpush.msra.mxu0 %v380
    %v382 = vand.u32 %v358, 4294901760
    %383 = vmatpush.msra.mxu0 %v382
    %v384 = vand.u32 %v357, 4294901760
    %385 = vmatpush.msra.mxu0 %v384
    %v386 = vand.u32 %v356, 4294901760
    %387 = vmatpush.msra.mxu0 %v386
    %v388 = vand.u32 %v355, 4294901760
    %389 = vmatpush.msra.mxu0 %v388
    %v390 = vand.u32 %v354, 4294901760
    %391 = vmatpush.msra.mxu0 %v390
    %v392 = vand.u32 %v353, 4294901760
    %393 = vmatpush.msra.mxu0 %v392
    %v394 = vand.u32 %v352, 4294901760
    %395 = vmatpush.msra.mxu0 %v394
    %v396 = vand.u32 %v351, 4294901760
    %397 = vmatpush.msra.mxu0 %v396
    %v398 = vand.u32 %v367, 4294901760
    %v399 = vsub.f32 %v367, %v398
    %v400 = vand.u32 %v399, 4294901760
    %v401 = vsub.f32 %v399, %v400
    %v402 = vand.u32 %v401, 4294901760
    %403 = vmatmul.f32.gmra.mxu0 %v402
    %v404 = vpop.f32.mrf.mxu0
    %v405 = vadd.f32 %v364, %v404
    %v406 = vand.u32 %v370, 4294901760
    %v407 = vsub.f32 %v370, %v406
    %v408 = vand.u32 %v407, 4294901760
    %v409 = vsub.f32 %v407, %v408
    %v410 = vand.u32 %v409, 4294901760
    %411 = vmatmul.f32.gmra.mxu0 %v410
    %v412 = vpop.f32.mrf.mxu0
    %v413 = vadd.f32 %v364, %v412
    %414 = vdwg.mxu0
    %415 = vmatpush.msra.mxu0 0.0
    %416 = vmatpush.msra.mxu0 0.0
    %417 = vmatpush.msra.mxu0 0.0
    %418 = vmatpush.msra.mxu0 0.0
    %419 = vmatpush.msra.mxu0 0.0
    %420 = vmatpush.msra.mxu0 0.0
    %v421 = vand.u32 %v360, 4294901760
    %v422 = vsub.f32 %v360, %v421
    %v423 = vand.u32 %v422, 4294901760
    %v424 = vsub.f32 %v422, %v423
    %v425 = vand.u32 %v424, 4294901760
    %426 = vmatpush.msra.mxu0 %v425
    %v427 = vand.u32 %v359, 4294901760
    %v428 = vsub.f32 %v359, %v427
    %v429 = vand.u32 %v428, 4294901760
    %v430 = vsub.f32 %v428, %v429
    %v431 = vand.u32 %v430, 4294901760
    %432 = vmatpush.msra.mxu0 %v431
    %v433 = vand.u32 %v358, 4294901760
    %v434 = vsub.f32 %v358, %v433
    %v435 = vand.u32 %v434, 4294901760
    %v436 = vsub.f32 %v434, %v435
    %v437 = vand.u32 %v436, 4294901760
    %438 = vmatpush.msra.mxu0 %v437
    %v439 = vand.u32 %v357, 4294901760
    %v440 = vsub.f32 %v357, %v439
    %v441 = vand.u32 %v440, 4294901760
    %v442 = vsub.f32 %v440, %v441
    %v443 = vand.u32 %v442, 4294901760
    %444 = vmatpush.msra.mxu0 %v443
    %v445 = vand.u32 %v356, 4294901760
    %v446 = vsub.f32 %v356, %v445
    %v447 = vand.u32 %v446, 4294901760
    %v448 = vsub.f32 %v446, %v447
    %v449 = vand.u32 %v448, 4294901760
    %450 = vmatpush.msra.mxu0 %v449
    %v451 = vand.u32 %v355, 4294901760
    %v452 = vsub.f32 %v355, %v451
    %v453 = vand.u32 %v452, 4294901760
    %v454 = vsub.f32 %v452, %v453
    %v455 = vand.u32 %v454, 4294901760
    %456 = vmatpush.msra.mxu0 %v455
    %v457 = vand.u32 %v354, 4294901760
    %v458 = vsub.f32 %v354, %v457
    %v459 = vand.u32 %v458, 4294901760
    %v460 = vsub.f32 %v458, %v459
    %v461 = vand.u32 %v460, 4294901760
    %462 = vmatpush.msra.mxu0 %v461
    %v463 = vand.u32 %v353, 4294901760
    %v464 = vsub.f32 %v353, %v463
    %v465 = vand.u32 %v464, 4294901760
    %v466 = vsub.f32 %v464, %v465
    %v467 = vand.u32 %v466, 4294901760
    %468 = vmatpush.msra.mxu0 %v467
    %v469 = vand.u32 %v352, 4294901760
    %v470 = vsub.f32 %v352, %v469
    %v471 = vand.u32 %v470, 4294901760
    %v472 = vsub.f32 %v470, %v471
    %v473 = vand.u32 %v472, 4294901760
    %474 = vmatpush.msra.mxu0 %v473
    %v475 = vand.u32 %v351, 4294901760
    %v476 = vsub.f32 %v351, %v475
    %v477 = vand.u32 %v476, 4294901760
    %v478 = vsub.f32 %v476, %v477
    %v479 = vand.u32 %v478, 4294901760
    %480 = vmatpush.msra.mxu0 %v479
    %v481 = vand.u32 %v367, 4294901760
    %482 = vmatmul.f32.gmra.mxu0 %v481
    %v483 = vpop.f32.mrf.mxu0
    %v484 = vadd.f32 %v405, %v483
    %v485 = vand.u32 %v370, 4294901760
    %486 = vmatmul.f32.gmra.mxu0 %v485
    %v487 = vpop.f32.mrf.mxu0
    %v488 = vadd.f32 %v413, %v487
    %489 = vdwg.mxu0
    %490 = vmatpush.msra.mxu0 0.0
    %491 = vmatpush.msra.mxu0 0.0
    %492 = vmatpush.msra.mxu0 0.0
    %493 = vmatpush.msra.mxu0 0.0
    %494 = vmatpush.msra.mxu0 0.0
    %495 = vmatpush.msra.mxu0 0.0
    %v496 = vand.u32 %v360, 4294901760
    %v497 = vsub.f32 %v360, %v496
    %498 = vmatpush.msra.mxu0 %v497
    %v499 = vand.u32 %v359, 4294901760
    %v500 = vsub.f32 %v359, %v499
    %501 = vmatpush.msra.mxu0 %v500
    %v502 = vand.u32 %v358, 4294901760
    %v503 = vsub.f32 %v358, %v502
    %504 = vmatpush.msra.mxu0 %v503
    %v505 = vand.u32 %v357, 4294901760
    %v506 = vsub.f32 %v357, %v505
    %507 = vmatpush.msra.mxu0 %v506
    %v508 = vand.u32 %v356, 4294901760
    %v509 = vsub.f32 %v356, %v508
    %510 = vmatpush.msra.mxu0 %v509
    %v511 = vand.u32 %v355, 4294901760
    %v512 = vsub.f32 %v355, %v511
    %513 = vmatpush.msra.mxu0 %v512
    %v514 = vand.u32 %v354, 4294901760
    %v515 = vsub.f32 %v354, %v514
    %516 = vmatpush.msra.mxu0 %v515
    %v517 = vand.u32 %v353, 4294901760
    %v518 = vsub.f32 %v353, %v517
    %519 = vmatpush.msra.mxu0 %v518
    %v520 = vand.u32 %v352, 4294901760
    %v521 = vsub.f32 %v352, %v520
    %522 = vmatpush.msra.mxu0 %v521
    %v523 = vand.u32 %v351, 4294901760
    %v524 = vsub.f32 %v351, %v523
    %525 = vmatpush.msra.mxu0 %v524
    %v526 = vand.u32 %v367, 4294901760
    %v527 = vsub.f32 %v367, %v526
    %528 = vmatmul.f32.gmra.mxu0 %v527
    %v529 = vpop.f32.mrf.mxu0
    %v530 = vadd.f32 %v484, %v529
    %v531 = vand.u32 %v370, 4294901760
    %v532 = vsub.f32 %v370, %v531
    %533 = vmatmul.f32.gmra.mxu0 %v532
    %v534 = vpop.f32.mrf.mxu0
    %v535 = vadd.f32 %v488, %v534
    %536 = vdwg.mxu0
    %537 = vmatpush.msra.mxu0 0.0
    %538 = vmatpush.msra.mxu0 0.0
    %539 = vmatpush.msra.mxu0 0.0
    %540 = vmatpush.msra.mxu0 0.0
    %541 = vmatpush.msra.mxu0 0.0
    %542 = vmatpush.msra.mxu0 0.0
    %v543 = vand.u32 %v360, 4294901760
    %544 = vmatpush.msra.mxu0 %v543
    %v545 = vand.u32 %v359, 4294901760
    %546 = vmatpush.msra.mxu0 %v545
    %v547 = vand.u32 %v358, 4294901760
    %548 = vmatpush.msra.mxu0 %v547
    %v549 = vand.u32 %v357, 4294901760
    %550 = vmatpush.msra.mxu0 %v549
    %v551 = vand.u32 %v356, 4294901760
    %552 = vmatpush.msra.mxu0 %v551
    %v553 = vand.u32 %v355, 4294901760
    %554 = vmatpush.msra.mxu0 %v553
    %v555 = vand.u32 %v354, 4294901760
    %556 = vmatpush.msra.mxu0 %v555
    %v557 = vand.u32 %v353, 4294901760
    %558 = vmatpush.msra.mxu0 %v557
    %v559 = vand.u32 %v352, 4294901760
    %560 = vmatpush.msra.mxu0 %v559
    %v561 = vand.u32 %v351, 4294901760
    %562 = vmatpush.msra.mxu0 %v561
    %v563 = vand.u32 %v367, 4294901760
    %v564 = vsub.f32 %v367, %v563
    %v565 = vand.u32 %v564, 4294901760
    %566 = vmatmul.f32.gmra.mxu0 %v565
    %v567 = vpop.f32.mrf.mxu0
    %v568 = vadd.f32 %v530, %v567
    %v569 = vand.u32 %v370, 4294901760
    %v570 = vsub.f32 %v370, %v569
    %v571 = vand.u32 %v570, 4294901760
    %572 = vmatmul.f32.gmra.mxu0 %v571
    %v573 = vpop.f32.mrf.mxu0
    %v574 = vadd.f32 %v535, %v573
    %575 = vdwg.mxu0
    %576 = vmatpush.msra.mxu0 0.0
    %577 = vmatpush.msra.mxu0 0.0
    %578 = vmatpush.msra.mxu0 0.0
    %579 = vmatpush.msra.mxu0 0.0
    %580 = vmatpush.msra.mxu0 0.0
    %581 = vmatpush.msra.mxu0 0.0
    %v582 = vand.u32 %v360, 4294901760
    %v583 = vsub.f32 %v360, %v582
    %v584 = vand.u32 %v583, 4294901760
    %585 = vmatpush.msra.mxu0 %v584
    %v586 = vand.u32 %v359, 4294901760
    %v587 = vsub.f32 %v359, %v586
    %v588 = vand.u32 %v587, 4294901760
    %589 = vmatpush.msra.mxu0 %v588
    %v590 = vand.u32 %v358, 4294901760
    %v591 = vsub.f32 %v358, %v590
    %v592 = vand.u32 %v591, 4294901760
    %593 = vmatpush.msra.mxu0 %v592
    %v594 = vand.u32 %v357, 4294901760
    %v595 = vsub.f32 %v357, %v594
    %v596 = vand.u32 %v595, 4294901760
    %597 = vmatpush.msra.mxu0 %v596
    %v598 = vand.u32 %v356, 4294901760
    %v599 = vsub.f32 %v356, %v598
    %v600 = vand.u32 %v599, 4294901760
    %601 = vmatpush.msra.mxu0 %v600
    %v602 = vand.u32 %v355, 4294901760
    %v603 = vsub.f32 %v355, %v602
    %v604 = vand.u32 %v603, 4294901760
    %605 = vmatpush.msra.mxu0 %v604
    %v606 = vand.u32 %v354, 4294901760
    %v607 = vsub.f32 %v354, %v606
    %v608 = vand.u32 %v607, 4294901760
    %609 = vmatpush.msra.mxu0 %v608
    %v610 = vand.u32 %v353, 4294901760
    %v611 = vsub.f32 %v353, %v610
    %v612 = vand.u32 %v611, 4294901760
    %613 = vmatpush.msra.mxu0 %v612
    %v614 = vand.u32 %v352, 4294901760
    %v615 = vsub.f32 %v352, %v614
    %v616 = vand.u32 %v615, 4294901760
    %617 = vmatpush.msra.mxu0 %v616
    %v618 = vand.u32 %v351, 4294901760
    %v619 = vsub.f32 %v351, %v618
    %v620 = vand.u32 %v619, 4294901760
    %621 = vmatpush.msra.mxu0 %v620
    %v622 = vand.u32 %v367, 4294901760
    %623 = vmatmul.f32.gmra.mxu0 %v622
    %v624 = vpop.f32.mrf.mxu0
    %v625 = vadd.f32 %v568, %v624
    %v626 = vand.u32 %v370, 4294901760
    %627 = vmatmul.f32.gmra.mxu0 %v626
    %v628 = vpop.f32.mrf.mxu0
    %v629 = vadd.f32 %v574, %v628
    %630 = vdwg.mxu0
    %631 = vmatpush.msra.mxu0 0.0
    %632 = vmatpush.msra.mxu0 0.0
    %633 = vmatpush.msra.mxu0 0.0
    %634 = vmatpush.msra.mxu0 0.0
    %635 = vmatpush.msra.mxu0 0.0
    %636 = vmatpush.msra.mxu0 0.0
    %v637 = vand.u32 %v360, 4294901760
    %638 = vmatpush.msra.mxu0 %v637
    %v639 = vand.u32 %v359, 4294901760
    %640 = vmatpush.msra.mxu0 %v639
    %v641 = vand.u32 %v358, 4294901760
    %642 = vmatpush.msra.mxu0 %v641
    %v643 = vand.u32 %v357, 4294901760
    %644 = vmatpush.msra.mxu0 %v643
    %v645 = vand.u32 %v356, 4294901760
    %646 = vmatpush.msra.mxu0 %v645
    %v647 = vand.u32 %v355, 4294901760
    %648 = vmatpush.msra.mxu0 %v647
    %v649 = vand.u32 %v354, 4294901760
    %650 = vmatpush.msra.mxu0 %v649
    %v651 = vand.u32 %v353, 4294901760
    %652 = vmatpush.msra.mxu0 %v651
    %v653 = vand.u32 %v352, 4294901760
    %654 = vmatpush.msra.mxu0 %v653
    %v655 = vand.u32 %v351, 4294901760
    %656 = vmatpush.msra.mxu0 %v655
    %v657 = vand.u32 %v367, 4294901760
    %658 = vmatmul.f32.gmra.mxu0 %v657
    %v659 = vpop.f32.mrf.mxu0
    %v660 = vadd.f32 %v625, %v659
    %v661 = vand.u32 %v370, 4294901760
    %662 = vmatmul.f32.gmra.mxu0 %v661
    %v663 = vpop.f32.mrf.mxu0
    %v664 = vadd.f32 %v629, %v663
    %665 = vdwg.mxu0
    %v666 = vmax.f32 %v660, 0.0
    %v667 = vmax.f32 %v664, 0.0
    %s668 = scalar_lea.vmem [#allocation2], 160
    %v669 = vld [vmem:[%s668] sm:$0xff]
    %v670 = vld [vmem:[%s668 + $0x8] sm:$0xff]
    %v671 = vld [vmem:[%s668 + $0x10] sm:$0xff]
    %v672 = vld [vmem:[%s668 + $0x18] sm:$0xff]
    %v673 = vld [vmem:[%s668 + $0x20] sm:$0xff]
    %v674 = vld [vmem:[%s668 + $0x28] sm:$0xff]
    %v675 = vld [vmem:[%s668 + $0x30] sm:$0xff]
    %v676 = vld [vmem:[%s668 + $0x38] sm:$0xff]
    %v677 = vld [vmem:[%s668 + $0x40] sm:$0xff]
    %v678 = vld [vmem:[%s668 + $0x48] sm:$0xff]
    %s679 = scalar_lea.vmem %s2, 2
    %v680 = vld [vmem:[%s679] sm:$0x1]
    %v682 = vperm.slane %v680, 0
    %v685 = vsel %vm47, %v666, 0
    %v688 = vsel %vm47, %v667, 0
    %690 = vmatpush.msra.mxu0 0.0
    %691 = vmatpush.msra.mxu0 0.0
    %692 = vmatpush.msra.mxu0 0.0
    %693 = vmatpush.msra.mxu0 0.0
    %694 = vmatpush.msra.mxu0 0.0
    %695 = vmatpush.msra.mxu0 0.0
    %v696 = vand.u32 %v678, 4294901760
    %697 = vmatpush.msra.mxu0 %v696
    %v698 = vand.u32 %v677, 4294901760
    %699 = vmatpush.msra.mxu0 %v698
    %v700 = vand.u32 %v676, 4294901760
    %701 = vmatpush.msra.mxu0 %v700
    %v702 = vand.u32 %v675, 4294901760
    %703 = vmatpush.msra.mxu0 %v702
    %v704 = vand.u32 %v674, 4294901760
    %705 = vmatpush.msra.mxu0 %v704
    %v706 = vand.u32 %v673, 4294901760
    %707 = vmatpush.msra.mxu0 %v706
    %v708 = vand.u32 %v672, 4294901760
    %709 = vmatpush.msra.mxu0 %v708
    %v710 = vand.u32 %v671, 4294901760
    %711 = vmatpush.msra.mxu0 %v710
    %v712 = vand.u32 %v670, 4294901760
    %713 = vmatpush.msra.mxu0 %v712
    %v714 = vand.u32 %v669, 4294901760
    %715 = vmatpush.msra.mxu0 %v714
    %v716 = vand.u32 %v685, 4294901760
    %v717 = vsub.f32 %v685, %v716
    %v718 = vand.u32 %v717, 4294901760
    %v719 = vsub.f32 %v717, %v718
    %v720 = vand.u32 %v719, 4294901760
    %721 = vmatmul.f32.gmra.mxu0 %v720
    %v722 = vpop.f32.mrf.mxu0
    %v723 = vadd.f32 %v682, %v722
    %v724 = vand.u32 %v688, 4294901760
    %v725 = vsub.f32 %v688, %v724
    %v726 = vand.u32 %v725, 4294901760
    %v727 = vsub.f32 %v725, %v726
    %v728 = vand.u32 %v727, 4294901760
    %729 = vmatmul.f32.gmra.mxu0 %v728
    %v730 = vpop.f32.mrf.mxu0
    %v731 = vadd.f32 %v682, %v730
    %732 = vdwg.mxu0
    %733 = vmatpush.msra.mxu0 0.0
    %734 = vmatpush.msra.mxu0 0.0
    %735 = vmatpush.msra.mxu0 0.0
    %736 = vmatpush.msra.mxu0 0.0
    %737 = vmatpush.msra.mxu0 0.0
    %738 = vmatpush.msra.mxu0 0.0
    %v739 = vand.u32 %v678, 4294901760
    %v740 = vsub.f32 %v678, %v739
    %v741 = vand.u32 %v740, 4294901760
    %v742 = vsub.f32 %v740, %v741
    %v743 = vand.u32 %v742, 4294901760
    %744 = vmatpush.msra.mxu0 %v743
    %v745 = vand.u32 %v677, 4294901760
    %v746 = vsub.f32 %v677, %v745
    %v747 = vand.u32 %v746, 4294901760
    %v748 = vsub.f32 %v746, %v747
    %v749 = vand.u32 %v748, 4294901760
    %750 = vmatpush.msra.mxu0 %v749
    %v751 = vand.u32 %v676, 4294901760
    %v752 = vsub.f32 %v676, %v751
    %v753 = vand.u32 %v752, 4294901760
    %v754 = vsub.f32 %v752, %v753
    %v755 = vand.u32 %v754, 4294901760
    %756 = vmatpush.msra.mxu0 %v755
    %v757 = vand.u32 %v675, 4294901760
    %v758 = vsub.f32 %v675, %v757
    %v759 = vand.u32 %v758, 4294901760
    %v760 = vsub.f32 %v758, %v759
    %v761 = vand.u32 %v760, 4294901760
    %762 = vmatpush.msra.mxu0 %v761
    %v763 = vand.u32 %v674, 4294901760
    %v764 = vsub.f32 %v674, %v763
    %v765 = vand.u32 %v764, 4294901760
    %v766 = vsub.f32 %v764, %v765
    %v767 = vand.u32 %v766, 4294901760
    %768 = vmatpush.msra.mxu0 %v767
    %v769 = vand.u32 %v673, 4294901760
    %v770 = vsub.f32 %v673, %v769
    %v771 = vand.u32 %v770, 4294901760
    %v772 = vsub.f32 %v770, %v771
    %v773 = vand.u32 %v772, 4294901760
    %774 = vmatpush.msra.mxu0 %v773
    %v775 = vand.u32 %v672, 4294901760
    %v776 = vsub.f32 %v672, %v775
    %v777 = vand.u32 %v776, 4294901760
    %v778 = vsub.f32 %v776, %v777
    %v779 = vand.u32 %v778, 4294901760
    %780 = vmatpush.msra.mxu0 %v779
    %v781 = vand.u32 %v671, 4294901760
    %v782 = vsub.f32 %v671, %v781
    %v783 = vand.u32 %v782, 4294901760
    %v784 = vsub.f32 %v782, %v783
    %v785 = vand.u32 %v784, 4294901760
    %786 = vmatpush.msra.mxu0 %v785
    %v787 = vand.u32 %v670, 4294901760
    %v788 = vsub.f32 %v670, %v787
    %v789 = vand.u32 %v788, 4294901760
    %v790 = vsub.f32 %v788, %v789
    %v791 = vand.u32 %v790, 4294901760
    %792 = vmatpush.msra.mxu0 %v791
    %v793 = vand.u32 %v669, 4294901760
    %v794 = vsub.f32 %v669, %v793
    %v795 = vand.u32 %v794, 4294901760
    %v796 = vsub.f32 %v794, %v795
    %v797 = vand.u32 %v796, 4294901760
    %798 = vmatpush.msra.mxu0 %v797
    %v799 = vand.u32 %v685, 4294901760
    %800 = vmatmul.f32.gmra.mxu0 %v799
    %v801 = vpop.f32.mrf.mxu0
    %v802 = vadd.f32 %v723, %v801
    %v803 = vand.u32 %v688, 4294901760
    %804 = vmatmul.f32.gmra.mxu0 %v803
    %v805 = vpop.f32.mrf.mxu0
    %v806 = vadd.f32 %v731, %v805
    %807 = vdwg.mxu0
    %808 = vmatpush.msra.mxu0 0.0
    %809 = vmatpush.msra.mxu0 0.0
    %810 = vmatpush.msra.mxu0 0.0
    %811 = vmatpush.msra.mxu0 0.0
    %812 = vmatpush.msra.mxu0 0.0
    %813 = vmatpush.msra.mxu0 0.0
    %v814 = vand.u32 %v678, 4294901760
    %v815 = vsub.f32 %v678, %v814
    %816 = vmatpush.msra.mxu0 %v815
    %v817 = vand.u32 %v677, 4294901760
    %v818 = vsub.f32 %v677, %v817
    %819 = vmatpush.msra.mxu0 %v818
    %v820 = vand.u32 %v676, 4294901760
    %v821 = vsub.f32 %v676, %v820
    %822 = vmatpush.msra.mxu0 %v821
    %v823 = vand.u32 %v675, 4294901760
    %v824 = vsub.f32 %v675, %v823
    %825 = vmatpush.msra.mxu0 %v824
    %v826 = vand.u32 %v674, 4294901760
    %v827 = vsub.f32 %v674, %v826
    %828 = vmatpush.msra.mxu0 %v827
    %v829 = vand.u32 %v673, 4294901760
    %v830 = vsub.f32 %v673, %v829
    %831 = vmatpush.msra.mxu0 %v830
    %v832 = vand.u32 %v672, 4294901760
    %v833 = vsub.f32 %v672, %v832
    %834 = vmatpush.msra.mxu0 %v833
    %v835 = vand.u32 %v671, 4294901760
    %v836 = vsub.f32 %v671, %v835
    %837 = vmatpush.msra.mxu0 %v836
    %v838 = vand.u32 %v670, 4294901760
    %v839 = vsub.f32 %v670, %v838
    %840 = vmatpush.msra.mxu0 %v839
    %v841 = vand.u32 %v669, 4294901760
    %v842 = vsub.f32 %v669, %v841
    %843 = vmatpush.msra.mxu0 %v842
    %v844 = vand.u32 %v685, 4294901760
    %v845 = vsub.f32 %v685, %v844
    %846 = vmatmul.f32.gmra.mxu0 %v845
    %v847 = vpop.f32.mrf.mxu0
    %v848 = vadd.f32 %v802, %v847
    %v849 = vand.u32 %v688, 4294901760
    %v850 = vsub.f32 %v688, %v849
    %851 = vmatmul.f32.gmra.mxu0 %v850
    %v852 = vpop.f32.mrf.mxu0
    %v853 = vadd.f32 %v806, %v852
    %854 = vdwg.mxu0
    %855 = vmatpush.msra.mxu0 0.0
    %856 = vmatpush.msra.mxu0 0.0
    %857 = vmatpush.msra.mxu0 0.0
    %858 = vmatpush.msra.mxu0 0.0
    %859 = vmatpush.msra.mxu0 0.0
    %860 = vmatpush.msra.mxu0 0.0
    %v861 = vand.u32 %v678, 4294901760
    %862 = vmatpush.msra.mxu0 %v861
    %v863 = vand.u32 %v677, 4294901760
    %864 = vmatpush.msra.mxu0 %v863
    %v865 = vand.u32 %v676, 4294901760
    %866 = vmatpush.msra.mxu0 %v865
    %v867 = vand.u32 %v675, 4294901760
    %868 = vmatpush.msra.mxu0 %v867
    %v869 = vand.u32 %v674, 4294901760
    %870 = vmatpush.msra.mxu0 %v869
    %v871 = vand.u32 %v673, 4294901760
    %872 = vmatpush.msra.mxu0 %v871
    %v873 = vand.u32 %v672, 4294901760
    %874 = vmatpush.msra.mxu0 %v873
    %v875 = vand.u32 %v671, 4294901760
    %876 = vmatpush.msra.mxu0 %v875
    %v877 = vand.u32 %v670, 4294901760
    %878 = vmatpush.msra.mxu0 %v877
    %v879 = vand.u32 %v669, 4294901760
    %880 = vmatpush.msra.mxu0 %v879
    %v881 = vand.u32 %v685, 4294901760
    %v882 = vsub.f32 %v685, %v881
    %v883 = vand.u32 %v882, 4294901760
    %884 = vmatmul.f32.gmra.mxu0 %v883
    %v885 = vpop.f32.mrf.mxu0
    %v886 = vadd.f32 %v848, %v885
    %v887 = vand.u32 %v688, 4294901760
    %v888 = vsub.f32 %v688, %v887
    %v889 = vand.u32 %v888, 4294901760
    %890 = vmatmul.f32.gmra.mxu0 %v889
    %v891 = vpop.f32.mrf.mxu0
    %v892 = vadd.f32 %v853, %v891
    %893 = vdwg.mxu0
    %894 = vmatpush.msra.mxu0 0.0
    %895 = vmatpush.msra.mxu0 0.0
    %896 = vmatpush.msra.mxu0 0.0
    %897 = vmatpush.msra.mxu0 0.0
    %898 = vmatpush.msra.mxu0 0.0
    %899 = vmatpush.msra.mxu0 0.0
    %v900 = vand.u32 %v678, 4294901760
    %v901 = vsub.f32 %v678, %v900
    %v902 = vand.u32 %v901, 4294901760
    %903 = vmatpush.msra.mxu0 %v902
    %v904 = vand.u32 %v677, 4294901760
    %v905 = vsub.f32 %v677, %v904
    %v906 = vand.u32 %v905, 4294901760
    %907 = vmatpush.msra.mxu0 %v906
    %v908 = vand.u32 %v676, 4294901760
    %v909 = vsub.f32 %v676, %v908
    %v910 = vand.u32 %v909, 4294901760
    %911 = vmatpush.msra.mxu0 %v910
    %v912 = vand.u32 %v675, 4294901760
    %v913 = vsub.f32 %v675, %v912
    %v914 = vand.u32 %v913, 4294901760
    %915 = vmatpush.msra.mxu0 %v914
    %v916 = vand.u32 %v674, 4294901760
    %v917 = vsub.f32 %v674, %v916
    %v918 = vand.u32 %v917, 4294901760
    %919 = vmatpush.msra.mxu0 %v918
    %v920 = vand.u32 %v673, 4294901760
    %v921 = vsub.f32 %v673, %v920
    %v922 = vand.u32 %v921, 4294901760
    %923 = vmatpush.msra.mxu0 %v922
    %v924 = vand.u32 %v672, 4294901760
    %v925 = vsub.f32 %v672, %v924
    %v926 = vand.u32 %v925, 4294901760
    %927 = vmatpush.msra.mxu0 %v926
    %v928 = vand.u32 %v671, 4294901760
    %v929 = vsub.f32 %v671, %v928
    %v930 = vand.u32 %v929, 4294901760
    %931 = vmatpush.msra.mxu0 %v930
    %v932 = vand.u32 %v670, 4294901760
    %v933 = vsub.f32 %v670, %v932
    %v934 = vand.u32 %v933, 4294901760
    %935 = vmatpush.msra.mxu0 %v934
    %v936 = vand.u32 %v669, 4294901760
    %v937 = vsub.f32 %v669, %v936
    %v938 = vand.u32 %v937, 4294901760
    %939 = vmatpush.msra.mxu0 %v938
    %v940 = vand.u32 %v685, 4294901760
    %941 = vmatmul.f32.gmra.mxu0 %v940
    %v942 = vpop.f32.mrf.mxu0
    %v943 = vadd.f32 %v886, %v942
    %v944 = vand.u32 %v688, 4294901760
    %945 = vmatmul.f32.gmra.mxu0 %v944
    %v946 = vpop.f32.mrf.mxu0
    %v947 = vadd.f32 %v892, %v946
    %948 = vdwg.mxu0
    %949 = vmatpush.msra.mxu0 0.0
    %950 = vmatpush.msra.mxu0 0.0
    %951 = vmatpush.msra.mxu0 0.0
    %952 = vmatpush.msra.mxu0 0.0
    %953 = vmatpush.msra.mxu0 0.0
    %954 = vmatpush.msra.mxu0 0.0
    %v955 = vand.u32 %v678, 4294901760
    %956 = vmatpush.msra.mxu0 %v955
    %v957 = vand.u32 %v677, 4294901760
    %958 = vmatpush.msra.mxu0 %v957
    %v959 = vand.u32 %v676, 4294901760
    %960 = vmatpush.msra.mxu0 %v959
    %v961 = vand.u32 %v675, 4294901760
    %962 = vmatpush.msra.mxu0 %v961
    %v963 = vand.u32 %v674, 4294901760
    %964 = vmatpush.msra.mxu0 %v963
    %v965 = vand.u32 %v673, 4294901760
    %966 = vmatpush.msra.mxu0 %v965
    %v967 = vand.u32 %v672, 4294901760
    %968 = vmatpush.msra.mxu0 %v967
    %v969 = vand.u32 %v671, 4294901760
    %970 = vmatpush.msra.mxu0 %v969
    %v971 = vand.u32 %v670, 4294901760
    %972 = vmatpush.msra.mxu0 %v971
    %v973 = vand.u32 %v669, 4294901760
    %974 = vmatpush.msra.mxu0 %v973
    %v975 = vand.u32 %v685, 4294901760
    %976 = vmatmul.f32.gmra.mxu0 %v975
    %v977 = vpop.f32.mrf.mxu0
    %v978 = vadd.f32 %v943, %v977
    %v979 = vand.u32 %v688, 4294901760
    %980 = vmatmul.f32.gmra.mxu0 %v979
    %v981 = vpop.f32.mrf.mxu0
    %v982 = vadd.f32 %v947, %v981
    %983 = vdwg.mxu0
    %v984 = vmax.f32 %v978, 0.0
    %v985 = vmax.f32 %v982, 0.0
    %988 = vrot.lane.b32.xlu0 %v984, 120
    %v989 = vpop.permute.xlu0 %988
    %990 = vrot.lane.b32.xlu0 %v985, 120
    %v991 = vpop.permute.xlu0 %990
    %v994 = vadd.f32 %v984, %v989
    %v995 = vadd.f32 %v985, %v991
    %vm996 = vcmask 64512
    %997 = vst.msk [vmem:[#allocation5] sm:$0xff] %vm996, %v994
    %998 = vst.msk [vmem:[#allocation5 + $0x8] sm:$0xff] %vm996, %v995
    // Predicated region
    $region18: #{bottlenecks_forward.1} parent=1 // pred_check
      _
    $region19: #{bottlenecks_forward.1} parent=1 // pred_check_branch
      %1000 = sbr.rel (0) target = $region21
    $region20: #{bottlenecks_forward.1} parent=1 // pred_region
      %1002 = vsyncadd [#allocation4], 0
      %s1003 = sshll.u32 [#allocation5], 4
      %s1004 = int_to_ptr.vmem [resolvable:$true] %s1003
      %s1005 = sshll.u32 %s3, 4
      %s1006 = int_to_ptr.hbm [resolvable:$true] %s1005
      %1011 = dma.vmem_to_hbm [thread:$0]  %s1004, 256, %s1006, [#allocation4], 128, 128, 8
    $region21: #{bottlenecks_forward.1} parent=1 // pred_fallthru
      _
    // Predicated region
    $region22: #{bottlenecks_forward.1} parent=1 // pred_check
      _
    $region23: #{bottlenecks_forward.1} parent=1 // pred_check_branch
      %1013 = sbr.rel (0) target = $region25
    $region24: #{bottlenecks_forward.1} parent=1 // pred_region
      %1015 = dma.done [#allocation4], 256
    $region25: #{bottlenecks_forward.1} parent=1 // pred_fallthru
      _
    %1016 = vsyncpa [#allocation3], 1
    %1017 = vsyncpa [#allocation4], 1

</llo_original>
